<compile_context>
chip_gen: v7x
topology: tpu7x:2x2x1
jax: 0.10.0
libtpu: 0.0.40
codegen_flags: <defaults>
</compile_context>

<pallas_src>
import jax
import jax.numpy as jnp
from jax.experimental import pallas as pl
from jax.experimental.pallas import tpu as pltpu


def _drop_path_sample_kernel(scale_ref, x_ref, o_ref):
    # scale_ref: SMEM (B,) f32 scalar-prefetch; x_ref/o_ref: (1, tR, L) tile.
    b = pl.program_id(0)
    o_ref[...] = (x_ref[...].astype(jnp.float32) * scale_ref[b]).astype(o_ref.dtype)


def _drop_path_rows_kernel(s_ref, x_ref, o_ref):
    # s_ref: VMEM (B, 1) f32 scale; x_ref/o_ref: (B, tN) tile (ragged path).
    o_ref[...] = (x_ref[...].astype(jnp.float32) * s_ref[...]).astype(o_ref.dtype)


def _sublane_packing(itemsize: int) -> int:
    # Rows per vreg sublane group: 8 for 32-bit, 16 for 16-bit, 32 for 8-bit.
    return max(8, 8 * (4 // max(1, itemsize)))


def _choose_layout(n_elems: int, itemsize: int, batch: int,
                   budget_bytes: int = 2 << 20):
    """Pick a lane-dense (R, L) per-sample view and a row-tile size tR.

    Returns (L, R, tR) with L a clean divisor of n_elems (multiple of 128),
    or None if no such divisor exists (caller uses the ragged 2-D path).
    """
    divisors = [c for c in (2048, 1024, 512, 256, 128) if n_elems % c == 0]
    if not divisors:
        return None

    # Aim for >= 4 total grid steps so the v7x megacore gets work on both TCs
    # and the pipeline has steps to overlap (harmless on single-TC v5e/v6e).
    want_rows = max(1, -(-4 // max(1, batch)))          # ceil(4 / B)
    L = next((c for c in divisors if n_elems // c >= want_rows), divisors[0])
    R = n_elems // L

    sub = _sublane_packing(itemsize)
    if R <= sub:
        return L, R, R                # whole (small) sample is one block

    max_rows = max(sub, (budget_bytes // (L * itemsize)) // sub * sub)
    tR = max(sub, min(max_rows, (R // sub) * sub))
    # Split further (down to one sublane group) if more grid steps are needed;
    # a non-dividing tR is fine: the last row block is clamped by Pallas.
    while -(-R // tR) < want_rows and tR > sub:
        tR -= sub
    return L, R, tR


def drop_path_pallas(x, drop_prob: float, key, training: bool = True):
    """Pallas equivalent of the PyTorch drop_path().

    x: (B, ...) array. Returns x unchanged if drop_prob == 0 or not training,
    else x / keep_prob * floor(keep_prob + U[0,1)) per sample.
    """
    if drop_prob == 0.0 or not training:
        return x

    keep_prob = 1.0 - drop_prob
    B = x.shape[0]
    n_elems = 1
    for d in x.shape[1:]:
        n_elems *= d
    itemsize = jnp.dtype(x.dtype).itemsize

    # Per-sample bernoulli scale: B f32 scalars of glue, streamed to the kernel.
    u = jax.random.uniform(key, (B,), dtype=jnp.float32)
    scale = (jnp.floor(keep_prob + u) / keep_prob).astype(jnp.float32)

    cost = pl.CostEstimate(flops=B * n_elems, transcendentals=0,
                           bytes_accessed=2 * B * n_elems * itemsize)

    layout = _choose_layout(n_elems, itemsize, B)
    if layout is not None:
        # ---- Divisible (lane-dense 3-D) path: no padding, no slicing. ----
        L, R, tR = layout
        x3 = x.reshape(B, R, L)                          # free view
        out = pl.pallas_call(
            _drop_path_sample_kernel,
            out_shape=jax.ShapeDtypeStruct((B, R, L), x.dtype),
            grid_spec=pltpu.PrefetchScalarGridSpec(
                num_scalar_prefetch=1,
                grid=(B, pl.cdiv(R, tR)),
                in_specs=[pl.BlockSpec((1, tR, L), lambda b, r, s: (b, r, 0))],
                out_specs=pl.BlockSpec((1, tR, L), lambda b, r, s: (b, r, 0)),
            ),
            compiler_params=pltpu.CompilerParams(
                dimension_semantics=("parallel", "parallel")),
            cost_estimate=cost,
        )(scale, x3)
        return out.reshape(x.shape)

    # ---- Ragged path: flat (B, n) view, partial last column block handled
    # in-kernel by Pallas block clamping (no host-side pad / slice). ----
    xf = x.reshape(B, n_elems)
    sub = _sublane_packing(itemsize)
    b_pad = -(-B // sub) * sub                           # VMEM sublane padding
    budget_bytes = 2 << 20
    tN = max(128, (budget_bytes // (b_pad * itemsize)) // 128 * 128)
    tN = min(tN, -(-n_elems // 128) * 128)               # at most one 128-granule OOB
    if n_elems < 128:
        tN = n_elems                                     # full-dim block is allowed

    out = pl.pallas_call(
        _drop_path_rows_kernel,
        out_shape=jax.ShapeDtypeStruct((B, n_elems), x.dtype),
        grid=(pl.cdiv(n_elems, tN),),
        in_specs=[pl.BlockSpec((B, 1), lambda j: (0, 0)),
                  pl.BlockSpec((B, tN), lambda j: (0, j))],
        out_specs=pl.BlockSpec((B, tN), lambda j: (0, j)),
        compiler_params=pltpu.CompilerParams(dimension_semantics=("parallel",)),
        cost_estimate=cost,
    )(scale.reshape(B, 1), xf)
    return out.reshape(x.shape)


class DropPath:
    """Mirror of the PyTorch DropPath module (no learnable params)."""

    def __init__(self, drop_prob=None):
        self.drop_prob = drop_prob
        self.training = True

    def __call__(self, x, key):
        p = 0.0 if self.drop_prob is None else float(self.drop_prob)
        return drop_path_pallas(x, p, key, training=self.training)


def _reference(x, drop_prob, key):
    keep_prob = 1.0 - drop_prob
    B = x.shape[0]
    u = jax.random.uniform(key, (B,), dtype=jnp.float32)
    scale = jnp.floor(keep_prob + u) / keep_prob
    scale = scale.reshape((B,) + (1,) * (x.ndim - 1))
    return (x.astype(jnp.float32) * scale).astype(x.dtype)


if __name__ == "__main__":
    key = jax.random.PRNGKey(0)
    kx, kmask, kx2, kx3 = jax.random.split(key, 4)

    drop_prob = 0.3
    module = DropPath(drop_prob)
    module.training = True

    # Case 1: lane-friendly f32 shape (divisible path).
    x = jax.random.normal(kx, (2, 4, 16, 16), dtype=jnp.float32)
    out = jax.block_until_ready(module(x, kmask))
    ref = _reference(x, drop_prob, kmask)
    assert out.shape == x.shape and out.dtype == x.dtype
    assert jnp.allclose(out, ref, atol=1e-6), "mismatch vs reference (case 1)"

    # Case 2: per-sample size not a multiple of 128 -> ragged in-kernel path
    # (no host-side jnp.pad or trailing slice).
    x2 = jax.random.normal(kx2, (2, 3, 14, 14), dtype=jnp.float32)
    out2 = jax.block_until_ready(module(x2, kmask))
    ref2 = _reference(x2, drop_prob, kmask)
    assert out2.shape == x2.shape
    assert jnp.allclose(out2, ref2, atol=1e-6), "mismatch vs reference (case 2)"

    # Case 3: bf16, multi row-block tiling with a clamped partial last block.
    x3 = jax.random.normal(kx3, (2, 48, 32, 32), dtype=jnp.bfloat16)
    out3 = jax.block_until_ready(module(x3, kmask))
    ref3 = _reference(x3, drop_prob, kmask)
    assert out3.shape == x3.shape and out3.dtype == x3.dtype
    assert jnp.allclose(out3.astype(jnp.float32), ref3.astype(jnp.float32),
                        atol=1e-2), "mismatch vs reference (case 3)"

    # Eval-mode / drop_prob=0 path is identity (no kernel launch needed).
    module.training = False
    out_eval = jax.block_until_ready(module(x, kmask))
    assert jnp.array_equal(out_eval, x)

    print("KERNEL_OK")
</pallas_src>

<mosaic_0001>
module attributes {stable_mosaic.version = 11 : i64} {
  func.func @_drop_path_sample_kernel(%arg0: i32, %arg1: i32, %arg2: memref<2xf32, #tpu.memory_space<smem>>, %arg3: memref<1x2x512xf32, #tpu.memory_space<vmem>>, %arg4: memref<1x2x512xf32, #tpu.memory_space<vmem>>) attributes {dimension_semantics = [#tpu.dimension_semantics<parallel>, #tpu.dimension_semantics<parallel>], iteration_bounds = array<i64: 2, 1>, scalar_prefetch = 1 : i64, scratch_operands = 0 : i64, tpu.core_type = #tpu.core_type<tc>, window_params = [{transform_indices = @transform_0, window_bounds = array<i64: 1, 2, 512>}, {transform_indices = @transform_1, window_bounds = array<i64: 1, 2, 512>}]} {
    %c0 = arith.constant 0 : index
    %c0_0 = arith.constant 0 : index
    %c0_1 = arith.constant 0 : index
    %0 = vector.load %arg3[%c0, %c0_0, %c0_1] : memref<1x2x512xf32, #tpu.memory_space<vmem>>, vector<1x2x512xf32>
    %1 = arith.index_cast %arg0 : i32 to index
    %2 = memref.load %arg2[%1] : memref<2xf32, #tpu.memory_space<smem>>
    %3 = vector.broadcast %2 : f32 to vector<1x2x512xf32>
    %4 = arith.mulf %0, %3 : vector<1x2x512xf32>
    %c0_2 = arith.constant 0 : index
    %c0_3 = arith.constant 0 : index
    %c0_4 = arith.constant 0 : index
    %5 = vector.load %arg4[%c0_2, %c0_3, %c0_4] : memref<1x2x512xf32, #tpu.memory_space<vmem>>, vector<1x2x512xf32>
    tpu.vector_store %arg4[%c0_2, %c0_3, %c0_4], %4 {strides = array<i32>} : memref<1x2x512xf32, #tpu.memory_space<vmem>>, vector<1x2x512xf32>,
    return
  }
  func.func @transform_0(%arg0: i32, %arg1: i32, %arg2: memref<2xf32, #tpu.memory_space<smem>>) -> (i32, i32, i32) {
    %c0_i32 = arith.constant 0 : i32
    %c0_i32_0 = arith.constant 0 : i32
    return %arg0, %arg1, %c0_i32 : i32, i32, i32
  }
  func.func @transform_1(%arg0: i32, %arg1: i32, %arg2: memref<2xf32, #tpu.memory_space<smem>>) -> (i32, i32, i32) {
    %c0_i32 = arith.constant 0 : i32
    %c0_i32_0 = arith.constant 0 : i32
    return %arg0, %arg1, %c0_i32 : i32, i32, i32
  }
}

</mosaic_0001>

<llo_original>
// kernel: tpu_custom_call.1
$region0: #{tpu_custom_call.1}
  #allocation0 [shape = 'u32[]', space=smem, size = 0x4, offset = 0x4, fixed_abs, tag = 'smem constant byte address 0x4 - core index']
  #allocation1 [shape = 'u32[144,128]{1,0:T(1,128)}', space=vmem, size = 0x12000, scoped, tag = 'internal scratch']
  #allocation2 [shape = 's32[1]{0}', space=sflag, size = 0x4, scoped, tag = 'scoped memory for tpu_custom_call.1']
  #allocation3 [shape = 'u8[512]{0}', space=smem, size = 0x200, scoped, tag = 'prefetched SMEM operand 0']
  %s0 = inlined_call_operand.hbm [shape: f32[2], index: 0, kind: input, shape index: {}]
  %s1 = inlined_call_operand.hbm [shape: f32[2,2,512], index: 1, kind: input, shape index: {}]
  %s2 = inlined_call_operand.hbm [shape: f32[2,2,512], index: 2, kind: output, shape index: {}]
  %s3 = sld [smem:[#allocation0]]
  $region41: #{tpu_custom_call.1} parent=0
    _
  %s5 = ssub.s32 1, %s3
  %s6 = scalar_select 0, %s5, %s3
  %8 = dma.hbm_to_smem %s0, 16, [#allocation3], [#allocation2]
  %9 = dma.done [#allocation2], 16
  %10 = sfence
  $region1: #{tpu_custom_call.1} parent=0
    #allocation4 [shape = 'u8[8192]{0}', space=vmem, size = 0x2000, scoped, tag = 'input window, operand 1']
    #allocation5 [shape = 's32[2]{0}', space=sflag, size = 0x8, scoped, tag = 'scoped memory for tpu_custom_call.1']
    #allocation6 [shape = 's32[2]{0}', space=sflag, size = 0x8, scoped, tag = 'scoped memory for tpu_custom_call.1']
    #allocation7 [shape = 'u8[8192]{0}', space=vmem, size = 0x2000, scoped, tag = 'output window, operand 0']
    %11 = vsyncpa [#allocation5], 0
    %s12 = scalar_lea.sflag [#allocation5], 1
    %13 = vsyncpa %s12, 0
    %14 = vsyncpa [#allocation6], 0
    %s15 = scalar_lea.sflag [#allocation6], 1
    %16 = vsyncpa %s15, 0
    loop: start=0, step=1, limit=4
    $region2: #{tpu_custom_call.1} parent=1 // loop_pre_header
      _
    $region3: #{tpu_custom_call.1} parent=1 // loop_header
      %s18 = sphi 0, %s22
      %p19 = scmp.ge.s32.totalorder %s18, 4
      %s25 = sphi 0, %s37
      %s26 = sphi 0, %s33
      %s27 = sphi 0, %s25
      %s28 = sphi 0, %s26
      %s29 = sphi 0, %s27
      %s30 = sphi 0, %s28
      %s42 = sphi 0, %s44
      %s45 = sphi 0, %s42
      %s46 = sphi 0, %s45
      %s62 = sphi 0, %s46
      %s70 = sphi 0, %s72
      %s73 = sphi 0, %s70
      %s74 = sphi 0, %s73
      %s90 = sphi 0, %s74
    $region4: #{tpu_custom_call.1} parent=1 // loop_header_branch
      %21 = sbr.rel (%p19) target = $region8
    $region5: #{tpu_custom_call.1} parent=1 // loop_body
      %s23 = ssub.s32 %s18, 1
      %s24 = ssub.s32 %s18, 2
      %s31 = sadd.s32 1, %s26
      %p32 = scmp.ge.s32.totalorder %s31, 1
      %s33 = scalar_select %p32, 0, %s31
      %s34 = sadd.s32 1, %s25
      %s35 = scalar_select %p32, %s34, %s25
      %p36 = scmp.ge.s32.totalorder %s35, 2
      %s37 = scalar_select %p36, 0, %s35
      %s38 = ssub.s32 %s25, %s37
      %s39 = ssub.s32 %s26, %s33
      %s40 = sor.u32 %s38, %s39
      %p41 = scmp.eq.s32.totalorder %s40, 0
      %s43 = sadd.s32 %s42, 1
      %s44 = scalar_select %p41, %s42, %s43
      %p47 = pneg %p41
      %p48 = scmp.eq.s32.totalorder %s18, 1
      %p49 = por %p47, %p48
      %p50 = scmp.ne.s32.totalorder %s42, %s45
      %p51 = scmp.eq.s32.totalorder %s18, 0
      %p52 = por %p50, %p51
      %p53 = scmp.ne.s32.totalorder %s42, %s45
      %p54 = scmp.eq.s32.totalorder %s23, 1
      %p55 = por %p53, %p54
      %p56 = scmp.ne.s32.totalorder %s45, %s46
      %p57 = scmp.eq.s32.totalorder %s23, 0
      %p58 = por %p56, %p57
      %p59 = scmp.ne.s32.totalorder %s45, %s46
      %p60 = scmp.eq.s32.totalorder %s24, 1
      %p61 = por %p59, %p60
      %p63 = scmp.ne.s32.totalorder %s46, %s62
      %p64 = scmp.eq.s32.totalorder %s24, 0
      %p65 = por %p63, %p64
      %s66 = ssub.s32 %s25, %s37
      %s67 = ssub.s32 %s26, %s33
      %s68 = sor.u32 %s66, %s67
      %p69 = scmp.eq.s32.totalorder %s68, 0
      %s71 = sadd.s32 %s70, 1
      %s72 = scalar_select %p69, %s70, %s71
      %p75 = pneg %p69
      %p76 = scmp.eq.s32.totalorder %s18, 1
      %p77 = por %p75, %p76
      %p78 = scmp.ne.s32.totalorder %s70, %s73
      %p79 = scmp.eq.s32.totalorder %s18, 0
      %p80 = por %p78, %p79
      %p81 = scmp.ne.s32.totalorder %s70, %s73
      %p82 = scmp.eq.s32.totalorder %s23, 1
      %p83 = por %p81, %p82
      %p84 = scmp.ne.s32.totalorder %s73, %s74
      %p85 = scmp.eq.s32.totalorder %s23, 0
      %p86 = por %p84, %p85
      %p87 = scmp.ne.s32.totalorder %s73, %s74
      %p88 = scmp.eq.s32.totalorder %s24, 1
      %p89 = por %p87, %p88
      %p91 = scmp.ne.s32.totalorder %s74, %s90
      %p92 = scmp.eq.s32.totalorder %s24, 0
      %p93 = por %p91, %p92
      %p94 = scmp.le.s32.totalorder 1, %s18
      %p95 = scmp.lt.s32.totalorder %s18, 3
      %p96 = pnand %p94, %p95
      %p97 = pneg %p96
      // Predicated region
      $region9: #{tpu_custom_call.1} parent=5 // pred_check
        _
      $region10: #{tpu_custom_call.1} parent=5 // pred_check_branch
        %99 = sbr.rel (%p96) target = $region12
      $region11: #{tpu_custom_call.1} parent=5 // pred_region
        %s100 = ssub.s32 %s18, 1
      $region12: #{tpu_custom_call.1} parent=5 // pred_fallthru
        _
      %p101 = scmp.lt.s32.totalorder %s18, 2
      // Predicated region
      $region13: #{tpu_custom_call.1} parent=5 // pred_check
        %p102 = pneg %p101
      $region14: #{tpu_custom_call.1} parent=5 // pred_check_branch
        %104 = sbr.rel (%p102) target = $region16
      $region15: #{tpu_custom_call.1} parent=5 // pred_region
        // Predicated region
        $region17: #{tpu_custom_call.1} parent=15 // pred_check
          %p105 = pneg %p52
        $region18: #{tpu_custom_call.1} parent=15 // pred_check_branch
          %107 = sbr.rel (%p105) target = $region20
        $region19: #{tpu_custom_call.1} parent=15 // pred_region
          %s108 = sand.u32 %s42, 1
          %s109 = scalar_lea.sflag [#allocation5], %s108
          %s110 = sand.u32 %s42, 1
          %s111 = smul.addr %s110, 8
          %s112 = scalar_lea.vmem [#allocation4], %s111
          %s114 = ssub.s32 128, 128
          %115 = vsyncadd %s109, %s114
          %s116 = smul.addr %s26, 4
          %s117 = smul.addr %s25, 4
          %s118 = sadd.s32 %s116, %s117
          %s119 = smul.addr %s118, 32
          %s120 = scalar_lea.hbm %s1, %s119
          %s122 = sshll.u32 %s112, 4
          %s123 = int_to_ptr.vmem [resolvable:$true] %s122
          %125 = dma.hbm_to_vmem [thread:$0]  %s120, 128, %s123, %s109
        $region20: #{tpu_custom_call.1} parent=15 // pred_fallthru
          _
      $region16: #{tpu_custom_call.1} parent=5 // pred_fallthru
        _
      %p126 = scmp.le.s32.totalorder 1, %s18
      %p127 = scmp.lt.s32.totalorder %s18, 3
      %p128 = pnand %p126, %p127
      %p129 = pneg %p128
      // Predicated region
      $region21: #{tpu_custom_call.1} parent=5 // pred_check
        _
      $region22: #{tpu_custom_call.1} parent=5 // pred_check_branch
        %131 = sbr.rel (%p128) target = $region24
      $region23: #{tpu_custom_call.1} parent=5 // pred_region
        %s132 = ssub.s32 %s18, 1
        %s133 = sand.u32 %s45, 1
        %s134 = scalar_lea.sflag [#allocation5], %s133
        %s135 = sand.u32 %s45, 1
        %s136 = smul.addr %s135, 8
        %s137 = scalar_lea.vmem [#allocation4], %s136
        // Predicated region
        $region25: #{tpu_custom_call.1} parent=23 // pred_check
          %p138 = pneg %p58
        $region26: #{tpu_custom_call.1} parent=23 // pred_check_branch
          %140 = sbr.rel (%p138) target = $region28
        $region27: #{tpu_custom_call.1} parent=23 // pred_region
          %141 = dma.done %s134, 128
        $region28: #{tpu_custom_call.1} parent=23 // pred_fallthru
          _
        %s142 = sand.u32 %s45, 1
        %s143 = scalar_lea.sflag [#allocation5], %s142
        %s144 = sand.u32 %s45, 1
        %s145 = smul.addr %s144, 8
        %s146 = scalar_lea.vmem [#allocation4], %s145
        %p147 = pneg %p58
        %p148 = pneg %p55
        %p149 = pneg %p86
        %p150 = pneg %p83
        %s151 = sand.u32 %s73, 1
        %s152 = scalar_lea.sflag [#allocation6], %s151
        %s153 = sand.u32 %s73, 1
        %s154 = smul.addr %s153, 8
        %s155 = scalar_lea.vmem [#allocation7], %s154
        %v156 = vld [vmem:[%s137] sm:$0xff]
        %s157 = sld [smem:[#allocation3 + %s27]]
        %v158 = vstv %s157
        %v159 = vmul.f32 %v156, %v158
        %160 = vst [vmem:[%s155] sm:$0xff] %v159
        %s161 = sand.u32 %s73, 1
        %s162 = scalar_lea.sflag [#allocation6], %s161
        %s163 = sand.u32 %s73, 1
        %s164 = smul.addr %s163, 8
        %s165 = scalar_lea.vmem [#allocation7], %s164
        // Predicated region
        $region29: #{tpu_custom_call.1} parent=23 // pred_check
          %p166 = pneg %p83
        $region30: #{tpu_custom_call.1} parent=23 // pred_check_branch
          %168 = sbr.rel (%p166) target = $region32
        $region31: #{tpu_custom_call.1} parent=23 // pred_region
          %s170 = ssub.s32 128, 128
          %171 = vsyncadd %s162, %s170
          %s172 = smul.addr %s28, 4
          %s173 = smul.addr %s27, 4
          %s174 = sadd.s32 %s172, %s173
          %s175 = smul.addr %s174, 32
          %s176 = scalar_lea.hbm %s2, %s175
          %s178 = sshll.u32 %s165, 4
          %s179 = int_to_ptr.vmem [resolvable:$true] %s178
          %181 = dma.vmem_to_hbm [thread:$0]  %s179, 128, %s176, %s162
        $region32: #{tpu_custom_call.1} parent=23 // pred_fallthru
          _
      $region24: #{tpu_custom_call.1} parent=5 // pred_fallthru
        _
      %p182 = scmp.le.s32.totalorder 2, %s18
      // Predicated region
      $region33: #{tpu_custom_call.1} parent=5 // pred_check
        %p183 = pneg %p182
      $region34: #{tpu_custom_call.1} parent=5 // pred_check_branch
        %185 = sbr.rel (%p183) target = $region36
      $region35: #{tpu_custom_call.1} parent=5 // pred_region
        %s186 = ssub.s32 %s18, 2
        // Predicated region
        $region37: #{tpu_custom_call.1} parent=35 // pred_check
          %p187 = pneg %p89
        $region38: #{tpu_custom_call.1} parent=35 // pred_check_branch
          %189 = sbr.rel (%p187) target = $region40
        $region39: #{tpu_custom_call.1} parent=35 // pred_region
          %s190 = sand.u32 %s74, 1
          %s191 = scalar_lea.sflag [#allocation6], %s190
          %s192 = sand.u32 %s74, 1
          %s193 = smul.addr %s192, 8
          %s194 = scalar_lea.vmem [#allocation7], %s193
          %195 = dma.done %s191, 128
        $region40: #{tpu_custom_call.1} parent=35 // pred_fallthru
          _
      $region36: #{tpu_custom_call.1} parent=5 // pred_fallthru
        _
    $region6: #{tpu_custom_call.1} parent=1 // loop_footer
      %s22 = sadd.s32 1, %s18
    $region7: #{tpu_custom_call.1} parent=1 // loop_footer_branch
      %17 = sbr.rel target = $region3
    $region8: #{tpu_custom_call.1} parent=1 // loop_exit
      _
    %196 = vsyncpa [#allocation5], 1
    %s197 = scalar_lea.sflag [#allocation5], 1
    %198 = vsyncpa %s197, 1
    %199 = vsyncpa [#allocation6], 1
    %s200 = scalar_lea.sflag [#allocation6], 1
    %201 = vsyncpa %s200, 1

</llo_original>
